<compile_context>
chip_gen: v6e
topology: v6e:2x2x1
jax: 0.10.0
libtpu: 0.0.40
codegen_flags: <defaults>
</compile_context>

<pallas_src>
import jax
import jax.numpy as jnp
from jax import lax
from jax.experimental import pallas as pl
from jax.experimental.pallas import tpu as pltpu


def _round_up(x, m):
    return (x + m - 1) // m * m


def _cdiv(a, b):
    return -(-a // b)


# ----------------------------------------------------------------------------
# Kernel (factory: folded vs. unfolded W3 -> GRU-input projection)
# ----------------------------------------------------------------------------
def _make_kernel(fold_w3):
    def _mlp(a_ref, s_ref, w1a_ref, b1_ref, w1s_ref, w2_ref, b2_ref, cdt):
        tb = a_ref.shape[0]
        nm = w1a_ref.shape[0]
        # one_hot(actions) built in-kernel; fused as a tiny K=num_moves matmul.
        onehot = (a_ref[...] ==
                  lax.broadcasted_iota(jnp.int32, (tb, nm), 1)).astype(cdt)
        h1 = jnp.dot(s_ref[...], w1s_ref[...], preferred_element_type=jnp.float32)
        h1 = h1 + jnp.dot(onehot, w1a_ref[...], preferred_element_type=jnp.float32)
        h1 = jnp.maximum(h1 + b1_ref[...], 0.0)
        h2 = jnp.dot(h1.astype(cdt), w2_ref[...], preferred_element_type=jnp.float32)
        return jnp.maximum(h2 + b2_ref[...], 0.0)

    def _gru(gi, h_ref, whh_ref, bhh_ref, out_ref, cdt):
        e = out_ref.shape[1]                     # un-padded belief width
        h = h_ref[...]                           # f32 carried state
        gh = jnp.dot(h.astype(cdt), whh_ref[...],
                     preferred_element_type=jnp.float32) + bhh_ref[...]
        g_rz = gi[:, :2 * e] + gh[:, :2 * e]     # n-block sum is never needed
        r = jax.nn.sigmoid(g_rz[:, :e])
        z = jax.nn.sigmoid(g_rz[:, e:])
        n = jnp.tanh(gi[:, 2 * e:] + r * gh[:, 2 * e:])
        out_ref[...] = (1.0 - z) * n + z * h

    if fold_w3:
        def kernel(a_ref, s_ref, h_ref, w1a_ref, b1_ref, w1s_ref, w2_ref, b2_ref,
                   w3ih_ref, b3ih_ref, whh_ref, bhh_ref, out_ref):
            cdt = w2_ref.dtype
            h2 = _mlp(a_ref, s_ref, w1a_ref, b1_ref, w1s_ref, w2_ref, b2_ref, cdt)
            gi = jnp.dot(h2.astype(cdt), w3ih_ref[...],
                         preferred_element_type=jnp.float32) + b3ih_ref[...]
            _gru(gi, h_ref, whh_ref, bhh_ref, out_ref, cdt)
    else:
        def kernel(a_ref, s_ref, h_ref, w1a_ref, b1_ref, w1s_ref, w2_ref, b2_ref,
                   w3_ref, b3_ref, wih_ref, bih_ref, whh_ref, bhh_ref, out_ref):
            cdt = w2_ref.dtype
            h2 = _mlp(a_ref, s_ref, w1a_ref, b1_ref, w1s_ref, w2_ref, b2_ref, cdt)
            u = jnp.dot(h2.astype(cdt), w3_ref[...],
                        preferred_element_type=jnp.float32) + b3_ref[...]
            gi = jnp.dot(u.astype(cdt), wih_ref[...],
                         preferred_element_type=jnp.float32) + bih_ref[...]
            _gru(gi, h_ref, whh_ref, bhh_ref, out_ref, cdt)
    return kernel


# ----------------------------------------------------------------------------
# One-time parameter preparation (hoisted out of the per-step forward)
# ----------------------------------------------------------------------------
def prepare_params(params, num_moves, use_bf16=True, fold_w3=None):
    f32 = jnp.float32
    e = params["gru_w_hh"].shape[1]              # emb_dim_belief
    h = params["lin3_w"].shape[0]                # hidden_dim_update
    h4 = params["lin1_w"].shape[0]               # 4 * hidden_dim_update
    s = params["lin1_w"].shape[1] - num_moves    # 2 * emb_dim_state
    cdt = jnp.bfloat16 if use_bf16 else f32
    sub = 16 if use_bf16 else 8                  # sublane pack for compute dtype

    h4p = _round_up(h4, 128)                     # lane-dense h1/h2 and W2 tiles
    hp = _round_up(h, sub)
    sp = _round_up(s, sub)                       # contraction dim: sublane mult only
    nmp = _round_up(num_moves, sub)

    w1t = params["lin1_w"].T.astype(f32)                               # [nm+S, 4H]
    w1a = jnp.pad(w1t[:num_moves], ((0, nmp - num_moves), (0, h4p - h4)))
    w1s = jnp.pad(w1t[num_moves:], ((0, sp - s), (0, h4p - h4)))
    b1 = jnp.pad(params["lin1_b"].astype(f32), (0, h4p - h4))[None, :]

    w2 = jnp.pad(params["lin2_w"].T.astype(f32), ((0, h4p - h4), (0, h4p - h4)))
    b2 = jnp.pad(params["lin2_b"].astype(f32), (0, h4p - h4))[None, :]

    w3 = jnp.pad(params["lin3_w"].T.astype(f32), ((0, h4p - h4), (0, hp - h)))  # [4Hp, Hp]
    b3 = jnp.pad(params["lin3_b"].astype(f32), (0, hp - h))[None, :]            # [1, Hp]
    wih = jnp.pad(params["gru_w_ih"].T.astype(f32), ((0, hp - h), (0, 0)))      # [Hp, 3E]
    bih = params["gru_b_ih"].astype(f32)[None, :]                               # [1, 3E]
    whh = params["gru_w_hh"].T.astype(f32)                                      # [E, 3E]
    bhh = params["gru_b_hh"].astype(f32)[None, :]                               # [1, 3E]

    if fold_w3 is None:
        # Fold Linear3 into the GRU input projection only when it saves MXU work
        # (for small E relative to H the fold inflates FLOPs; for E >> H it wins).
        fold_w3 = h4 * (3 * e) <= h4 * h + h * (3 * e)

    prep = {
        "w1a": w1a.astype(cdt), "b1": b1,
        "w1s": w1s.astype(cdt),
        "w2": w2.astype(cdt), "b2": b2,
        "whh": whh.astype(cdt), "bhh": bhh,
        "fold_w3": bool(fold_w3), "compute_dtype": cdt,
        "E": e, "S": s, "Sp": sp, "NMp": nmp, "H4p": h4p, "Hp": hp,
        "num_moves": num_moves,
    }
    if fold_w3:
        prep["w3ih"] = (w3 @ wih).astype(cdt)     # [4Hp, 3E] (exact f32 fold)
        prep["b3ih"] = b3 @ wih + bih             # [1, 3E]
    else:
        prep["w3"] = w3.astype(cdt)
        prep["b3"] = b3
        prep["wih"] = wih.astype(cdt)
        prep["bih"] = bih
    return prep


# ----------------------------------------------------------------------------
# Forward wrapper
# ----------------------------------------------------------------------------
def belief_update_forward(beliefs, origin_states, result_states, actions, prep,
                          donate_beliefs=False):
    """One belief-update step.

    For a rollout loop, keep `beliefs` row-padded to a tile multiple and pass
    donate_beliefs=True so the output reuses the same HBM buffer and no
    per-step pad / slice glue runs at all.
    """
    f32 = jnp.float32
    b = beliefs.shape[0]
    e, s, sp = prep["E"], prep["S"], prep["Sp"]
    nmp, h4p, hp = prep["NMp"], prep["H4p"], prep["Hp"]
    cdt = prep["compute_dtype"]
    fold = prep["fold_w3"]

    # --- tiny per-step glue (gather / one-hot / row-bias streams removed) ----
    states = jnp.concatenate([origin_states, result_states], axis=1).astype(cdt)
    if sp > s:
        states = jnp.pad(states, ((0, 0), (0, sp - s)))
    acts = actions.astype(jnp.int32).reshape(b, 1)
    hbel = beliefs.astype(f32)

    # --- batch tiling: large lane-dense tiles; >=2 tiles for v7x megacore ----
    row_mult = 16                                     # covers bf16/f32/int32 sublanes
    b_al = _round_up(b, row_mult)
    tile_b = min(1024, b_al)
    if b_al >= 2 * row_mult:                          # give both v7x TCs work
        tile_b = min(tile_b, _round_up(_cdiv(b_al, 2), row_mult))
    bp = _round_up(b_al, tile_b)
    if bp > b:
        pad = ((0, bp - b), (0, 0))
        states = jnp.pad(states, pad)
        acts = jnp.pad(acts, pad)
        hbel = jnp.pad(hbel, pad)

    grid = (bp // tile_b,)

    def bspec(cols):
        return pl.BlockSpec((tile_b, cols), lambda i: (i, 0))

    def cspec(a):                                     # grid-resident constant
        return pl.BlockSpec(a.shape, lambda i: (0, 0))

    if fold:
        w_names = ("w1a", "b1", "w1s", "w2", "b2", "w3ih", "b3ih", "whh", "bhh")
    else:
        w_names = ("w1a", "b1", "w1s", "w2", "b2", "w3", "b3", "wih", "bih",
                   "whh", "bhh")
    weights = [prep[k] for k in w_names]

    in_specs = [bspec(1), bspec(sp), bspec(e)] + [cspec(w) for w in weights]

    # --- explicit VMEM budget: weights (x2 buffering), per-tile I/O (x2) and
    # compiler-materialized intermediates (h1, h2, u, gi, gh, one-hot) --------
    w_bytes = sum(int(w.size) * w.dtype.itemsize for w in weights)
    io_bytes = tile_b * (4 + sp * jnp.dtype(cdt).itemsize + 2 * e * 4)
    inter_bytes = tile_b * 4 * (2 * h4p + hp + nmp + 3 * (3 * e))
    vmem_limit = int(min(max(2 * w_bytes + 2 * io_bytes + inter_bytes + (4 << 20),
                             16 << 20), 48 << 20))

    out = pl.pallas_call(
        _make_kernel(fold),
        out_shape=jax.ShapeDtypeStruct((bp, e), f32),
        grid=grid,
        in_specs=in_specs,
        out_specs=bspec(e),
        # beliefs (input index 2) can be updated in place across a rollout.
        input_output_aliases={2: 0} if donate_beliefs else {},
        compiler_params=pltpu.CompilerParams(
            dimension_semantics=("parallel",),
            vmem_limit_bytes=vmem_limit),
    )(acts, states, hbel, *weights)

    return out[:b] if bp > b else out


# ----------------------------------------------------------------------------
# Synthetic parameters + pure-JAX reference (PyTorch semantics)
# ----------------------------------------------------------------------------
def init_params(key, emb_dim_belief, emb_dim_state, num_moves, hidden_dim_update):
    in_dim = num_moves + 2 * emb_dim_state
    h4 = 4 * hidden_dim_update
    h = hidden_dim_update
    e = emb_dim_belief
    ks = jax.random.split(key, 10)

    def u(k, shape, fan_in):
        bound = 1.0 / jnp.sqrt(fan_in)
        return jax.random.uniform(k, shape, jnp.float32, -bound, bound)

    return {
        "lin1_w": u(ks[0], (h4, in_dim), in_dim),
        "lin1_b": u(ks[1], (h4,), in_dim),
        "lin2_w": u(ks[2], (h4, h4), h4),
        "lin2_b": u(ks[3], (h4,), h4),
        "lin3_w": u(ks[4], (h, h4), h4),
        "lin3_b": u(ks[5], (h,), h4),
        "gru_w_ih": u(ks[6], (3 * e, h), e),
        "gru_b_ih": u(ks[7], (3 * e,), e),
        "gru_w_hh": u(ks[8], (3 * e, e), e),
        "gru_b_hh": u(ks[9], (3 * e,), e),
    }


def _reference(beliefs, origin_states, result_states, actions, params, num_moves):
    a = jax.nn.one_hot(actions, num_moves, dtype=jnp.float32)
    x = jnp.concatenate([a, origin_states, result_states], axis=1)
    h1 = jax.nn.relu(x @ params["lin1_w"].T + params["lin1_b"])
    h2 = jax.nn.relu(h1 @ params["lin2_w"].T + params["lin2_b"])
    u = h2 @ params["lin3_w"].T + params["lin3_b"]
    gi = u @ params["gru_w_ih"].T + params["gru_b_ih"]
    gh = beliefs @ params["gru_w_hh"].T + params["gru_b_hh"]
    e = beliefs.shape[1]
    r = jax.nn.sigmoid(gi[:, :e] + gh[:, :e])
    z = jax.nn.sigmoid(gi[:, e:2 * e] + gh[:, e:2 * e])
    n = jnp.tanh(gi[:, 2 * e:] + r * gh[:, 2 * e:])
    return (1.0 - z) * n + z * beliefs


if __name__ == "__main__":
    B = 8
    emb_dim_belief = 32
    emb_dim_state = 16
    num_moves = 4
    hidden_dim_update = 32

    key = jax.random.PRNGKey(0)
    k_b, k_o, k_r, k_a, k_p = jax.random.split(key, 5)

    beliefs = jax.random.normal(k_b, (B, emb_dim_belief), jnp.float32)
    origin_states = jax.random.normal(k_o, (B, emb_dim_state), jnp.float32)
    result_states = jax.random.normal(k_r, (B, emb_dim_state), jnp.float32)
    actions = jax.random.randint(k_a, (B,), 0, num_moves, jnp.int32)

    params = init_params(k_p, emb_dim_belief, emb_dim_state, num_moves,
                         hidden_dim_update)
    ref = _reference(beliefs, origin_states, result_states, actions, params,
                     num_moves)

    # 1) f32 matmuls, auto-selected (unfolded) projection path: tight check.
    prep_f32 = prepare_params(params, num_moves, use_bf16=False)
    out_f32 = jax.block_until_ready(
        belief_update_forward(beliefs, origin_states, result_states, actions,
                              prep_f32))
    assert out_f32.shape == (B, emb_dim_belief)
    assert jnp.allclose(out_f32, ref, atol=1e-4, rtol=1e-4), "f32 mismatch vs reference"

    # 2) bf16 matmul inputs (f32 accumulation / gate math): the fast TPU path.
    prep_bf16 = prepare_params(params, num_moves, use_bf16=True)
    out_bf16 = jax.block_until_ready(
        belief_update_forward(beliefs, origin_states, result_states, actions,
                              prep_bf16))
    assert out_bf16.shape == (B, emb_dim_belief)
    assert jnp.allclose(out_bf16, ref, atol=6e-2, rtol=6e-2), "bf16 mismatch vs reference"

    # 3) Folded W3->Wih path + in-place (aliased) belief update, f32.
    prep_fold = prepare_params(params, num_moves, use_bf16=False, fold_w3=True)
    out_fold = jax.block_until_ready(
        belief_update_forward(jnp.array(beliefs), origin_states, result_states,
                              actions, prep_fold, donate_beliefs=True))
    assert out_fold.shape == (B, emb_dim_belief)
    assert jnp.allclose(out_fold, ref, atol=1e-3, rtol=1e-3), "folded-path mismatch"

    print("KERNEL_OK")
</pallas_src>

<mosaic_0001>
module attributes {stable_mosaic.version = 11 : i64} {
  func.func @kernel(%arg0: i32, %arg1: memref<16x1xi32, #tpu.memory_space<vmem>>, %arg2: memref<16x32xf32, #tpu.memory_space<vmem>>, %arg3: memref<16x32xf32, #tpu.memory_space<vmem>>, %arg4: memref<8x128xf32, #tpu.memory_space<vmem>>, %arg5: memref<1x128xf32, #tpu.memory_space<vmem>>, %arg6: memref<32x128xf32, #tpu.memory_space<vmem>>, %arg7: memref<128x128xf32, #tpu.memory_space<vmem>>, %arg8: memref<1x128xf32, #tpu.memory_space<vmem>>, %arg9: memref<128x32xf32, #tpu.memory_space<vmem>>, %arg10: memref<1x32xf32, #tpu.memory_space<vmem>>, %arg11: memref<32x96xf32, #tpu.memory_space<vmem>>, %arg12: memref<1x96xf32, #tpu.memory_space<vmem>>, %arg13: memref<32x96xf32, #tpu.memory_space<vmem>>, %arg14: memref<1x96xf32, #tpu.memory_space<vmem>>, %arg15: memref<16x32xf32, #tpu.memory_space<vmem>>) attributes {dimension_semantics = [#tpu.dimension_semantics<parallel>], iteration_bounds = array<i64: 1>, scalar_prefetch = 0 : i64, scratch_operands = 0 : i64, tpu.core_type = #tpu.core_type<tc>, window_params = [{transform_indices = @transform_0, window_bounds = array<i64: 16, 1>}, {transform_indices = @transform_1, window_bounds = array<i64: 16, 32>}, {transform_indices = @transform_2, window_bounds = array<i64: 16, 32>}, {pipeline_mode = #tpu.pipeline_mode<synchronous>, transform_indices = @transform_3, window_bounds = array<i64: 8, 128>}, {pipeline_mode = #tpu.pipeline_mode<synchronous>, transform_indices = @transform_4, window_bounds = array<i64: 1, 128>}, {pipeline_mode = #tpu.pipeline_mode<synchronous>, transform_indices = @transform_5, window_bounds = array<i64: 32, 128>}, {pipeline_mode = #tpu.pipeline_mode<synchronous>, transform_indices = @transform_6, window_bounds = array<i64: 128, 128>}, {pipeline_mode = #tpu.pipeline_mode<synchronous>, transform_indices = @transform_7, window_bounds = array<i64: 1, 128>}, {pipeline_mode = #tpu.pipeline_mode<synchronous>, transform_indices = @transform_8, window_bounds = array<i64: 128, 32>}, {pipeline_mode = #tpu.pipeline_mode<synchronous>, transform_indices = @transform_9, window_bounds = array<i64: 1, 32>}, {pipeline_mode = #tpu.pipeline_mode<synchronous>, transform_indices = @transform_10, window_bounds = array<i64: 32, 96>}, {pipeline_mode = #tpu.pipeline_mode<synchronous>, transform_indices = @transform_11, window_bounds = array<i64: 1, 96>}, {pipeline_mode = #tpu.pipeline_mode<synchronous>, transform_indices = @transform_12, window_bounds = array<i64: 32, 96>}, {pipeline_mode = #tpu.pipeline_mode<synchronous>, transform_indices = @transform_13, window_bounds = array<i64: 1, 96>}, {transform_indices = @transform_14, window_bounds = array<i64: 16, 32>}]} {
    %c0 = arith.constant 0 : index
    %c0_0 = arith.constant 0 : index
    %0 = vector.load %arg1[%c0, %c0_0] : memref<16x1xi32, #tpu.memory_space<vmem>>, vector<16x1xi32>
    %1 = tpu.iota {dimensions = array<i32: 1>} : vector<16x8xi32>
    %2 = vector.broadcast %0 : vector<16x1xi32> to vector<16x8xi32>
    %3 = arith.cmpi eq, %2, %1 : vector<16x8xi32>
    %4 = arith.extui %3 : vector<16x8xi1> to vector<16x8xi32>
    %5 = arith.sitofp %4 : vector<16x8xi32> to vector<16x8xf32>
    %c0_1 = arith.constant 0 : index
    %c0_2 = arith.constant 0 : index
    %6 = vector.load %arg2[%c0_1, %c0_2] : memref<16x32xf32, #tpu.memory_space<vmem>>, vector<16x32xf32>
    %c0_3 = arith.constant 0 : index
    %c0_4 = arith.constant 0 : index
    %7 = vector.load %arg6[%c0_3, %c0_4] : memref<32x128xf32, #tpu.memory_space<vmem>>, vector<32x128xf32>
    %cst = arith.constant dense<0.000000e+00> : vector<16x128xf32>
    %8 = tpu.matmul %6, %7, %cst {dimension_numbers = #tpu.dot_dimension_numbers<[1], [0], [0], [1], [0, 0, 1, 1], [], []>} : vector<16x32xf32>, vector<32x128xf32>, vector<16x128xf32> -> vector<16x128xf32>
    %c0_5 = arith.constant 0 : index
    %c0_6 = arith.constant 0 : index
    %9 = vector.load %arg4[%c0_5, %c0_6] : memref<8x128xf32, #tpu.memory_space<vmem>>, vector<8x128xf32>
    %cst_7 = arith.constant dense<0.000000e+00> : vector<16x128xf32>
    %10 = tpu.matmul %5, %9, %cst_7 {dimension_numbers = #tpu.dot_dimension_numbers<[1], [0], [0], [1], [0, 0, 1, 1], [], []>} : vector<16x8xf32>, vector<8x128xf32>, vector<16x128xf32> -> vector<16x128xf32>
    %11 = arith.addf %8, %10 : vector<16x128xf32>
    %c0_8 = arith.constant 0 : index
    %c0_9 = arith.constant 0 : index
    %12 = vector.load %arg5[%c0_8, %c0_9] : memref<1x128xf32, #tpu.memory_space<vmem>>, vector<1x128xf32>
    %13 = vector.broadcast %12 : vector<1x128xf32> to vector<16x128xf32>
    %14 = arith.addf %11, %13 : vector<16x128xf32>
    %cst_10 = arith.constant 0.000000e+00 : f32
    %15 = vector.broadcast %cst_10 : f32 to vector<16x128xf32>
    %16 = arith.maximumf %14, %15 : vector<16x128xf32>
    %c0_11 = arith.constant 0 : index
    %c0_12 = arith.constant 0 : index
    %17 = vector.load %arg7[%c0_11, %c0_12] : memref<128x128xf32, #tpu.memory_space<vmem>>, vector<128x128xf32>
    %cst_13 = arith.constant dense<0.000000e+00> : vector<16x128xf32>
    %18 = tpu.matmul %16, %17, %cst_13 {dimension_numbers = #tpu.dot_dimension_numbers<[1], [0], [0], [1], [0, 0, 1, 1], [], []>} : vector<16x128xf32>, vector<128x128xf32>, vector<16x128xf32> -> vector<16x128xf32>
    %c0_14 = arith.constant 0 : index
    %c0_15 = arith.constant 0 : index
    %19 = vector.load %arg8[%c0_14, %c0_15] : memref<1x128xf32, #tpu.memory_space<vmem>>, vector<1x128xf32>
    %20 = vector.broadcast %19 : vector<1x128xf32> to vector<16x128xf32>
    %21 = arith.addf %18, %20 : vector<16x128xf32>
    %cst_16 = arith.constant 0.000000e+00 : f32
    %22 = vector.broadcast %cst_16 : f32 to vector<16x128xf32>
    %23 = arith.maximumf %21, %22 : vector<16x128xf32>
    %c0_17 = arith.constant 0 : index
    %c0_18 = arith.constant 0 : index
    %24 = vector.load %arg9[%c0_17, %c0_18] : memref<128x32xf32, #tpu.memory_space<vmem>>, vector<128x32xf32>
    %cst_19 = arith.constant dense<0.000000e+00> : vector<16x32xf32>
    %25 = tpu.matmul %23, %24, %cst_19 {dimension_numbers = #tpu.dot_dimension_numbers<[1], [0], [0], [1], [0, 0, 1, 1], [], []>} : vector<16x128xf32>, vector<128x32xf32>, vector<16x32xf32> -> vector<16x32xf32>
    %c0_20 = arith.constant 0 : index
    %c0_21 = arith.constant 0 : index
    %26 = vector.load %arg10[%c0_20, %c0_21] : memref<1x32xf32, #tpu.memory_space<vmem>>, vector<1x32xf32>
    %27 = vector.broadcast %26 : vector<1x32xf32> to vector<16x32xf32>
    %28 = arith.addf %25, %27 : vector<16x32xf32>
    %c0_22 = arith.constant 0 : index
    %c0_23 = arith.constant 0 : index
    %29 = vector.load %arg11[%c0_22, %c0_23] : memref<32x96xf32, #tpu.memory_space<vmem>>, vector<32x96xf32>
    %cst_24 = arith.constant dense<0.000000e+00> : vector<16x96xf32>
    %30 = tpu.matmul %28, %29, %cst_24 {dimension_numbers = #tpu.dot_dimension_numbers<[1], [0], [0], [1], [0, 0, 1, 1], [], []>} : vector<16x32xf32>, vector<32x96xf32>, vector<16x96xf32> -> vector<16x96xf32>
    %c0_25 = arith.constant 0 : index
    %c0_26 = arith.constant 0 : index
    %31 = vector.load %arg12[%c0_25, %c0_26] : memref<1x96xf32, #tpu.memory_space<vmem>>, vector<1x96xf32>
    %32 = vector.broadcast %31 : vector<1x96xf32> to vector<16x96xf32>
    %33 = arith.addf %30, %32 : vector<16x96xf32>
    %c0_27 = arith.constant 0 : index
    %c0_28 = arith.constant 0 : index
    %34 = vector.load %arg3[%c0_27, %c0_28] : memref<16x32xf32, #tpu.memory_space<vmem>>, vector<16x32xf32>
    %c0_29 = arith.constant 0 : index
    %c0_30 = arith.constant 0 : index
    %35 = vector.load %arg13[%c0_29, %c0_30] : memref<32x96xf32, #tpu.memory_space<vmem>>, vector<32x96xf32>
    %cst_31 = arith.constant dense<0.000000e+00> : vector<16x96xf32>
    %36 = tpu.matmul %34, %35, %cst_31 {dimension_numbers = #tpu.dot_dimension_numbers<[1], [0], [0], [1], [0, 0, 1, 1], [], []>} : vector<16x32xf32>, vector<32x96xf32>, vector<16x96xf32> -> vector<16x96xf32>
    %c0_32 = arith.constant 0 : index
    %c0_33 = arith.constant 0 : index
    %37 = vector.load %arg14[%c0_32, %c0_33] : memref<1x96xf32, #tpu.memory_space<vmem>>, vector<1x96xf32>
    %38 = vector.broadcast %37 : vector<1x96xf32> to vector<16x96xf32>
    %39 = arith.addf %36, %38 : vector<16x96xf32>
    %40 = vector.extract_strided_slice %33 {offsets = [0, 0], sizes = [16, 64], strides = [1, 1]} : vector<16x96xf32> to vector<16x64xf32>
    %41 = vector.extract_strided_slice %39 {offsets = [0, 0], sizes = [16, 64], strides = [1, 1]} : vector<16x96xf32> to vector<16x64xf32>
    %42 = arith.addf %40, %41 : vector<16x64xf32>
    %43 = vector.extract_strided_slice %42 {offsets = [0, 0], sizes = [16, 32], strides = [1, 1]} : vector<16x64xf32> to vector<16x32xf32>
    %44 = arith.negf %43 : vector<16x32xf32>
    %45 = math.exp %44 : vector<16x32xf32>
    %cst_34 = arith.constant 1.000000e+00 : f32
    %46 = vector.broadcast %cst_34 : f32 to vector<16x32xf32>
    %47 = arith.addf %46, %45 : vector<16x32xf32>
    %48 = arith.divf %46, %47 : vector<16x32xf32>
    %49 = vector.extract_strided_slice %42 {offsets = [0, 32], sizes = [16, 32], strides = [1, 1]} : vector<16x64xf32> to vector<16x32xf32>
    %50 = arith.negf %49 : vector<16x32xf32>
    %51 = math.exp %50 : vector<16x32xf32>
    %cst_35 = arith.constant 1.000000e+00 : f32
    %52 = vector.broadcast %cst_35 : f32 to vector<16x32xf32>
    %53 = arith.addf %52, %51 : vector<16x32xf32>
    %54 = arith.divf %52, %53 : vector<16x32xf32>
    %55 = vector.extract_strided_slice %33 {offsets = [0, 64], sizes = [16, 32], strides = [1, 1]} : vector<16x96xf32> to vector<16x32xf32>
    %56 = vector.extract_strided_slice %39 {offsets = [0, 64], sizes = [16, 32], strides = [1, 1]} : vector<16x96xf32> to vector<16x32xf32>
    %57 = arith.mulf %48, %56 : vector<16x32xf32>
    %58 = arith.addf %55, %57 : vector<16x32xf32>
    %59 = math.tanh %58 : vector<16x32xf32>
    %cst_36 = arith.constant 1.000000e+00 : f32
    %60 = vector.broadcast %cst_36 : f32 to vector<16x32xf32>
    %61 = arith.subf %60, %54 : vector<16x32xf32>
    %62 = arith.mulf %61, %59 : vector<16x32xf32>
    %63 = arith.mulf %54, %34 : vector<16x32xf32>
    %64 = arith.addf %62, %63 : vector<16x32xf32>
    %c0_37 = arith.constant 0 : index
    %c0_38 = arith.constant 0 : index
    %65 = vector.load %arg15[%c0_37, %c0_38] : memref<16x32xf32, #tpu.memory_space<vmem>>, vector<16x32xf32>
    tpu.vector_store %arg15[%c0_37, %c0_38], %64 {strides = array<i32>} : memref<16x32xf32, #tpu.memory_space<vmem>>, vector<16x32xf32>,
    return
  }
  func.func @transform_0(%arg0: i32) -> (i32, i32) {
    %c0_i32 = arith.constant 0 : i32
    %c0_i32_0 = arith.constant 0 : i32
    return %arg0, %c0_i32 : i32, i32
  }
  func.func @transform_1(%arg0: i32) -> (i32, i32) {
    %c0_i32 = arith.constant 0 : i32
    %c0_i32_0 = arith.constant 0 : i32
    return %arg0, %c0_i32 : i32, i32
  }
  func.func @transform_2(%arg0: i32) -> (i32, i32) {
    %c0_i32 = arith.constant 0 : i32
    %c0_i32_0 = arith.constant 0 : i32
    return %arg0, %c0_i32 : i32, i32
  }
  func.func @transform_3(%arg0: i32) -> (i32, i32) {
    %c0_i32 = arith.constant 0 : i32
    %c0_i32_0 = arith.constant 0 : i32
    %c0_i32_1 = arith.constant 0 : i32
    return %c0_i32, %c0_i32_0 : i32, i32
  }
  func.func @transform_4(%arg0: i32) -> (i32, i32) {
    %c0_i32 = arith.constant 0 : i32
    %c0_i32_0 = arith.constant 0 : i32
    %c0_i32_1 = arith.constant 0 : i32
    return %c0_i32, %c0_i32_0 : i32, i32
  }
  func.func @transform_5(%arg0: i32) -> (i32, i32) {
    %c0_i32 = arith.constant 0 : i32
    %c0_i32_0 = arith.constant 0 : i32
    %c0_i32_1 = arith.constant 0 : i32
    return %c0_i32, %c0_i32_0 : i32, i32
  }
  func.func @transform_6(%arg0: i32) -> (i32, i32) {
    %c0_i32 = arith.constant 0 : i32
    %c0_i32_0 = arith.constant 0 : i32
    %c0_i32_1 = arith.constant 0 : i32
    return %c0_i32, %c0_i32_0 : i32, i32
  }
  func.func @transform_7(%arg0: i32) -> (i32, i32) {
    %c0_i32 = arith.constant 0 : i32
    %c0_i32_0 = arith.constant 0 : i32
    %c0_i32_1 = arith.constant 0 : i32
    return %c0_i32, %c0_i32_0 : i32, i32
  }
  func.func @transform_8(%arg0: i32) -> (i32, i32) {
    %c0_i32 = arith.constant 0 : i32
    %c0_i32_0 = arith.constant 0 : i32
    %c0_i32_1 = arith.constant 0 : i32
    return %c0_i32, %c0_i32_0 : i32, i32
  }
  func.func @transform_9(%arg0: i32) -> (i32, i32) {
    %c0_i32 = arith.constant 0 : i32
    %c0_i32_0 = arith.constant 0 : i32
    %c0_i32_1 = arith.constant 0 : i32
    return %c0_i32, %c0_i32_0 : i32, i32
  }
  func.func @transform_10(%arg0: i32) -> (i32, i32) {
    %c0_i32 = arith.constant 0 : i32
    %c0_i32_0 = arith.constant 0 : i32
    %c0_i32_1 = arith.constant 0 : i32
    return %c0_i32, %c0_i32_0 : i32, i32
  }
  func.func @transform_11(%arg0: i32) -> (i32, i32) {
    %c0_i32 = arith.constant 0 : i32
    %c0_i32_0 = arith.constant 0 : i32
    %c0_i32_1 = arith.constant 0 : i32
    return %c0_i32, %c0_i32_0 : i32, i32
  }
  func.func @transform_12(%arg0: i32) -> (i32, i32) {
    %c0_i32 = arith.constant 0 : i32
    %c0_i32_0 = arith.constant 0 : i32
    %c0_i32_1 = arith.constant 0 : i32
    return %c0_i32, %c0_i32_0 : i32, i32
  }
  func.func @transform_13(%arg0: i32) -> (i32, i32) {
    %c0_i32 = arith.constant 0 : i32
    %c0_i32_0 = arith.constant 0 : i32
    %c0_i32_1 = arith.constant 0 : i32
    return %c0_i32, %c0_i32_0 : i32, i32
  }
  func.func @transform_14(%arg0: i32) -> (i32, i32) {
    %c0_i32 = arith.constant 0 : i32
    %c0_i32_0 = arith.constant 0 : i32
    return %arg0, %c0_i32 : i32, i32
  }
}

</mosaic_0001>

<llo_original>
// kernel: tpu_custom_call.1
$region0: #{tpu_custom_call.1}
  #allocation0 [shape = 'u32[]', space=smem, size = 0x4, offset = 0x4, fixed_abs, tag = 'smem constant byte address 0x4 - core index']
  #allocation1 [shape = 'u32[144,128]{1,0:T(1,128)}', space=vmem, size = 0x12000, scoped, tag = 'internal scratch']
  %s0 = inlined_call_operand.vmem [shape: s32[16,1], index: 0, kind: input, shape index: {}]
  %s1 = inlined_call_operand.hbm [shape: f32[16,32], index: 1, kind: input, shape index: {}]
  %s2 = inlined_call_operand.hbm [shape: f32[16,32], index: 2, kind: input, shape index: {}]
  %s3 = inlined_call_operand.hbm [shape: f32[8,128], index: 3, kind: input, shape index: {}]
  %s4 = inlined_call_operand.vmem [shape: f32[1,128], index: 4, kind: input, shape index: {}]
  %s5 = inlined_call_operand.vmem [shape: f32[32,128], index: 5, kind: input, shape index: {}]
  %s6 = inlined_call_operand.vmem [shape: f32[128,128], index: 6, kind: input, shape index: {}]
  %s7 = inlined_call_operand.vmem [shape: f32[1,128], index: 7, kind: input, shape index: {}]
  %s8 = inlined_call_operand.vmem [shape: f32[128,32], index: 8, kind: input, shape index: {}]
  %s9 = inlined_call_operand.vmem [shape: f32[1,32], index: 9, kind: input, shape index: {}]
  %s10 = inlined_call_operand.vmem [shape: f32[32,96], index: 10, kind: input, shape index: {}]
  %s11 = inlined_call_operand.hbm [shape: f32[1,96], index: 11, kind: input, shape index: {}]
  %s12 = inlined_call_operand.hbm [shape: f32[32,96], index: 12, kind: input, shape index: {}]
  %s13 = inlined_call_operand.vmem [shape: f32[1,96], index: 13, kind: input, shape index: {}]
  %s14 = inlined_call_operand.hbm [shape: f32[16,32], index: 14, kind: output, shape index: {}]
  %s15 = sld [smem:[#allocation0]]
  $region86: #{tpu_custom_call.1} parent=0
    _
  %s17 = ssub.s32 1, %s15
  %s18 = scalar_select 0, %s17, %s15
  $region1: #{tpu_custom_call.1} parent=0
    #allocation2 [shape = 'u8[8192]{0}', space=vmem, size = 0x2000, scoped, tag = 'input window, operand 1, single buffered']
    #allocation3 [shape = 's32[1]{0}', space=sflag, size = 0x4, scoped, tag = 'scoped memory for tpu_custom_call.1']
    #allocation4 [shape = 's32[1]{0}', space=sflag, size = 0x4, scoped, tag = 'scoped memory for tpu_custom_call.1']
    #allocation5 [shape = 'u8[8192]{0}', space=vmem, size = 0x2000, scoped, tag = 'input window, operand 2, single buffered']
    #allocation6 [shape = 's32[1]{0}', space=sflag, size = 0x4, scoped, tag = 'scoped memory for tpu_custom_call.1']
    #allocation7 [shape = 'u8[4096]{0}', space=vmem, size = 0x1000, scoped, tag = 'input window, operand 3, single buffered']
    #allocation8 [shape = 'u8[512]{0}', space=vmem, size = 0x400, scoped, tag = 'input window, operand 11, single buffered']
    #allocation9 [shape = 's32[1]{0}', space=sflag, size = 0x4, scoped, tag = 'scoped memory for tpu_custom_call.1']
    #allocation10 [shape = 'u8[16384]{0}', space=vmem, size = 0x4000, scoped, tag = 'input window, operand 12, single buffered']
    #allocation11 [shape = 'u8[8192]{0}', space=vmem, size = 0x2000, scoped, tag = 'output window, operand 0, single buffered']
    %19 = vsyncpa [#allocation3], 0
    %20 = vsyncpa [#allocation6], 0
    %21 = vsyncpa [#allocation9], 0
    %22 = vsyncpa [#allocation4], 0
    // Predicated region
    $region2: #{tpu_custom_call.1} parent=1 // pred_check
      _
    $region3: #{tpu_custom_call.1} parent=1 // pred_check_branch
      %24 = sbr.rel (0) target = $region5
    $region4: #{tpu_custom_call.1} parent=1 // pred_region
      _
    $region5: #{tpu_custom_call.1} parent=1 // pred_fallthru
      _
    // Predicated region
    $region6: #{tpu_custom_call.1} parent=1 // pred_check
      _
    $region7: #{tpu_custom_call.1} parent=1 // pred_check_branch
      %26 = sbr.rel (0) target = $region9
    $region8: #{tpu_custom_call.1} parent=1 // pred_region
      %s28 = ssub.s32 256, 256
      %29 = vsyncadd [#allocation3], %s28
      %s30 = sshll.u32 [#allocation2], 4
      %s31 = int_to_ptr.vmem [resolvable:$true] %s30
      %36 = dma.hbm_to_vmem [thread:$0]  %s1, 256, %s31, [#allocation3], 128, 128, 8
    $region9: #{tpu_custom_call.1} parent=1 // pred_fallthru
      _
    // Predicated region
    $region10: #{tpu_custom_call.1} parent=1 // pred_check
      _
    $region11: #{tpu_custom_call.1} parent=1 // pred_check_branch
      %38 = sbr.rel (0) target = $region13
    $region12: #{tpu_custom_call.1} parent=1 // pred_region
      %s40 = ssub.s32 256, 256
      %41 = vsyncadd [#allocation6], %s40
      %s42 = sshll.u32 [#allocation5], 4
      %s43 = int_to_ptr.vmem [resolvable:$true] %s42
      %48 = dma.hbm_to_vmem [thread:$0]  %s2, 256, %s43, [#allocation6], 128, 128, 8
    $region13: #{tpu_custom_call.1} parent=1 // pred_fallthru
      _
    // Predicated region
    $region14: #{tpu_custom_call.1} parent=1 // pred_check
      _
    $region15: #{tpu_custom_call.1} parent=1 // pred_check_branch
      %50 = sbr.rel (0) target = $region17
    $region16: #{tpu_custom_call.1} parent=1 // pred_region
      %s52 = ssub.s32 128, 128
      %53 = vsyncadd [#allocation6], %s52
      %s55 = sshll.u32 [#allocation7], 4
      %s56 = int_to_ptr.vmem [resolvable:$true] %s55
      %58 = dma.hbm_to_vmem [thread:$0]  %s3, 128, %s56, [#allocation6]
    $region17: #{tpu_custom_call.1} parent=1 // pred_fallthru
      _
    // Predicated region
    $region18: #{tpu_custom_call.1} parent=1 // pred_check
      _
    $region19: #{tpu_custom_call.1} parent=1 // pred_check_branch
      %60 = sbr.rel (0) target = $region21
    $region20: #{tpu_custom_call.1} parent=1 // pred_region
      _
    $region21: #{tpu_custom_call.1} parent=1 // pred_fallthru
      _
    // Predicated region
    $region22: #{tpu_custom_call.1} parent=1 // pred_check
      _
    $region23: #{tpu_custom_call.1} parent=1 // pred_check_branch
      %62 = sbr.rel (0) target = $region25
    $region24: #{tpu_custom_call.1} parent=1 // pred_region
      _
    $region25: #{tpu_custom_call.1} parent=1 // pred_fallthru
      _
    // Predicated region
    $region26: #{tpu_custom_call.1} parent=1 // pred_check
      _
    $region27: #{tpu_custom_call.1} parent=1 // pred_check_branch
      %64 = sbr.rel (0) target = $region29
    $region28: #{tpu_custom_call.1} parent=1 // pred_region
      _
    $region29: #{tpu_custom_call.1} parent=1 // pred_fallthru
      _
    // Predicated region
    $region30: #{tpu_custom_call.1} parent=1 // pred_check
      _
    $region31: #{tpu_custom_call.1} parent=1 // pred_check_branch
      %66 = sbr.rel (0) target = $region33
    $region32: #{tpu_custom_call.1} parent=1 // pred_region
      _
    $region33: #{tpu_custom_call.1} parent=1 // pred_fallthru
      _
    // Predicated region
    $region34: #{tpu_custom_call.1} parent=1 // pred_check
      _
    $region35: #{tpu_custom_call.1} parent=1 // pred_check_branch
      %68 = sbr.rel (0) target = $region37
    $region36: #{tpu_custom_call.1} parent=1 // pred_region
      _
    $region37: #{tpu_custom_call.1} parent=1 // pred_fallthru
      _
    // Predicated region
    $region38: #{tpu_custom_call.1} parent=1 // pred_check
      _
    $region39: #{tpu_custom_call.1} parent=1 // pred_check_branch
      %70 = sbr.rel (0) target = $region41
    $region40: #{tpu_custom_call.1} parent=1 // pred_region
      _
    $region41: #{tpu_custom_call.1} parent=1 // pred_fallthru
      _
    // Predicated region
    $region42: #{tpu_custom_call.1} parent=1 // pred_check
      _
    $region43: #{tpu_custom_call.1} parent=1 // pred_check_branch
      %72 = sbr.rel (0) target = $region45
    $region44: #{tpu_custom_call.1} parent=1 // pred_region
      _
    $region45: #{tpu_custom_call.1} parent=1 // pred_fallthru
      _
    // Predicated region
    $region46: #{tpu_custom_call.1} parent=1 // pred_check
      _
    $region47: #{tpu_custom_call.1} parent=1 // pred_check_branch
      %74 = sbr.rel (0) target = $region49
    $region48: #{tpu_custom_call.1} parent=1 // pred_region
      %s76 = ssub.s32 16, 16
      %77 = vsyncadd [#allocation9], %s76
      %s79 = sshll.u32 [#allocation8], 4
      %s80 = int_to_ptr.vmem [resolvable:$true] %s79
      %82 = dma.hbm_to_vmem [thread:$0]  %s11, 16, %s80, [#allocation9]
    $region49: #{tpu_custom_call.1} parent=1 // pred_fallthru
      _
    // Predicated region
    $region50: #{tpu_custom_call.1} parent=1 // pred_check
      _
    $region51: #{tpu_custom_call.1} parent=1 // pred_check_branch
      %84 = sbr.rel (0) target = $region53
    $region52: #{tpu_custom_call.1} parent=1 // pred_region
      %s86 = ssub.s32 512, 512
      %87 = vsyncadd [#allocation9], %s86
      %s88 = sshll.u32 [#allocation10], 4
      %s89 = int_to_ptr.vmem [resolvable:$true] %s88
      %94 = dma.hbm_to_vmem [thread:$0]  %s12, 512, %s89, [#allocation9], 128, 128, 8
    $region53: #{tpu_custom_call.1} parent=1 // pred_fallthru
      _
    // Predicated region
    $region54: #{tpu_custom_call.1} parent=1 // pred_check
      _
    $region55: #{tpu_custom_call.1} parent=1 // pred_check_branch
      %96 = sbr.rel (0) target = $region57
    $region56: #{tpu_custom_call.1} parent=1 // pred_region
      _
    $region57: #{tpu_custom_call.1} parent=1 // pred_fallthru
      _
    // Predicated region
    $region58: #{tpu_custom_call.1} parent=1 // pred_check
      _
    $region59: #{tpu_custom_call.1} parent=1 // pred_check_branch
      %98 = sbr.rel (0) target = $region61
    $region60: #{tpu_custom_call.1} parent=1 // pred_region
      %99 = dma.done [#allocation3], 256
    $region61: #{tpu_custom_call.1} parent=1 // pred_fallthru
      _
    // Predicated region
    $region62: #{tpu_custom_call.1} parent=1 // pred_check
      _
    $region63: #{tpu_custom_call.1} parent=1 // pred_check_branch
      %101 = sbr.rel (0) target = $region65
    $region64: #{tpu_custom_call.1} parent=1 // pred_region
      %102 = dma.done [#allocation6], 256
    $region65: #{tpu_custom_call.1} parent=1 // pred_fallthru
      _
    // Predicated region
    $region66: #{tpu_custom_call.1} parent=1 // pred_check
      _
    $region67: #{tpu_custom_call.1} parent=1 // pred_check_branch
      %104 = sbr.rel (0) target = $region69
    $region68: #{tpu_custom_call.1} parent=1 // pred_region
      %105 = dma.done [#allocation6], 128
    $region69: #{tpu_custom_call.1} parent=1 // pred_fallthru
      _
    // Predicated region
    $region70: #{tpu_custom_call.1} parent=1 // pred_check
      _
    $region71: #{tpu_custom_call.1} parent=1 // pred_check_branch
      %107 = sbr.rel (0) target = $region73
    $region72: #{tpu_custom_call.1} parent=1 // pred_region
      %108 = dma.done [#allocation9], 16
    $region73: #{tpu_custom_call.1} parent=1 // pred_fallthru
      _
    // Predicated region
    $region74: #{tpu_custom_call.1} parent=1 // pred_check
      _
    $region75: #{tpu_custom_call.1} parent=1 // pred_check_branch
      %110 = sbr.rel (0) target = $region77
    $region76: #{tpu_custom_call.1} parent=1 // pred_region
      %111 = dma.done [#allocation9], 512
    $region77: #{tpu_custom_call.1} parent=1 // pred_fallthru
      _
    %v112 = vld [vmem:[%s0] sm:$0xff]
    %v113 = vld [vmem:[%s0 + $0x8] sm:$0xff]
    %v114 = vlaneseq
    %v115 = vand.u32 %v114, 127
    %116 = vset.pattern.permute.xlu0 0
    %117 = vperm.xlu0 %116, %v112
    %v118 = vpop.permute.xlu0 %117
    %119 = vset.pattern.permute.xlu0 0
    %120 = vperm.xlu0 %119, %v113
    %v121 = vpop.permute.xlu0 %120
    %vm122 = vcmp.eq.s32.totalorder %v118, %v115
    %vm123 = vcmp.eq.s32.totalorder %v121, %v115
    %v124 = vsel %vm122, 1, 0
    %v125 = vsel %vm123, 1, 0
    %v126 = vcvt.s32.f32 %v124
    %v127 = vcvt.s32.f32 %v125
    %v128 = vld [vmem:[#allocation2] sm:$0xff]
    %v129 = vld [vmem:[#allocation2 + $0x8] sm:$0xff]
    %v130 = vld [vmem:[%s5] sm:$0xff]
    %v131 = vld [vmem:[%s5 + $0x8] sm:$0xff]
    %v132 = vld [vmem:[%s5 + $0x10] sm:$0xff]
    %v133 = vld [vmem:[%s5 + $0x18] sm:$0xff]
    %v134 = vld [vmem:[#allocation7] sm:$0xff]
    %vm135 = vcmask 64512
    %v137 = vsel %vm135, %v126, 0
    %v140 = vsel %vm135, %v127, 0
    %142 = vmatprep.subr.mxu0 0.0
    %143 = vmatpush1.msra.mxu0 0.0
    %144 = vmatprep.subr.mxu0 0.0
    %145 = vmatpush1.msra.mxu0 0.0
    %146 = vmatprep.subr.mxu0 0.0
    %147 = vmatpush1.msra.mxu0 0.0
    %148 = vmatprep.subr.mxu0 0.0
    %149 = vmatpush1.msra.mxu0 0.0
    %150 = vmatprep.subr.mxu0 0.0
    %151 = vmatpush1.msra.mxu0 0.0
    %152 = vmatprep.subr.mxu0 0.0
    %153 = vmatpush1.msra.mxu0 0.0
    %154 = vmatprep.subr.mxu0 0.0
    %155 = vmatpush1.msra.mxu0 0.0
    %156 = vmatprep.subr.mxu0 0.0
    %157 = vmatpush1.msra.mxu0 0.0
    %158 = vmatprep.subr.mxu0 0.0
    %159 = vmatpush1.msra.mxu0 0.0
    %160 = vmatprep.subr.mxu0 0.0
    %161 = vmatpush1.msra.mxu0 0.0
    %162 = vmatprep.subr.mxu0 0.0
    %163 = vmatpush1.msra.mxu0 0.0
    %164 = vmatprep.subr.mxu0 0.0
    %165 = vmatpush1.msra.mxu0 0.0
    %166 = vmatprep.subr.mxu0 0.0
    %167 = vmatpush1.msra.mxu0 0.0
    %168 = vmatprep.subr.mxu0 0.0
    %169 = vmatpush1.msra.mxu0 0.0
    %170 = vmatprep.subr.mxu0 0.0
    %171 = vmatpush1.msra.mxu0 0.0
    %172 = vmatprep.subr.mxu0 0.0
    %173 = vmatpush1.msra.mxu0 %v134
    %174 = vmatprep.subr.mxu0 0.0
    %175 = vmatpush2.msra.mxu0 0.0
    %176 = vmatprep.subr.mxu0 0.0
    %177 = vmatpush2.msra.mxu0 0.0
    %178 = vmatprep.subr.mxu0 0.0
    %179 = vmatpush2.msra.mxu0 0.0
    %180 = vmatprep.subr.mxu0 0.0
    %181 = vmatpush2.msra.mxu0 0.0
    %182 = vmatprep.subr.mxu0 0.0
    %183 = vmatpush2.msra.mxu0 0.0
    %184 = vmatprep.subr.mxu0 0.0
    %185 = vmatpush2.msra.mxu0 0.0
    %186 = vmatprep.subr.mxu0 0.0
    %187 = vmatpush2.msra.mxu0 0.0
    %188 = vmatprep.subr.mxu0 0.0
    %189 = vmatpush2.msra.mxu0 0.0
    %190 = vmatprep.subr.mxu0 0.0
    %191 = vmatpush2.msra.mxu0 0.0
    %192 = vmatprep.subr.mxu0 0.0
    %193 = vmatpush2.msra.mxu0 0.0
    %194 = vmatprep.subr.mxu0 0.0
    %195 = vmatpush2.msra.mxu0 0.0
    %196 = vmatprep.subr.mxu0 0.0
    %197 = vmatpush2.msra.mxu0 0.0
    %198 = vmatprep.subr.mxu0 0.0
    %199 = vmatpush2.msra.mxu0 0.0
    %200 = vmatprep.subr.mxu0 0.0
    %201 = vmatpush2.msra.mxu0 0.0
    %202 = vmatprep.subr.mxu0 0.0
    %203 = vmatpush2.msra.mxu0 0.0
    %204 = vmatprep.subr.mxu0 0.0
    %205 = vmatpush2.msra.mxu0 0.0
    %206 = vmatprep.mubr.f32.mxu0 0.0
    %207 = vmatmul.mubr.f32.gmra.mxu0 %v137
    %v208 = vpop.f32.mrf.mxu0
    %v209 = vadd.f32 0.0, %v208
    %v210 = vpop.f32.mrf.mxu0
    %211 = vmatprep.mubr.f32.mxu0 0.0
    %212 = vmatmul.mubr.f32.gmra.mxu0 %v140
    %v213 = vpop.f32.mrf.mxu0
    %v214 = vadd.f32 0.0, %v213
    %v215 = vpop.f32.mrf.mxu0
    %216 = vdwg.mxu0
    %vm217 = vcmask 261120
    %v219 = vsel %vm217, %v128, 0
    %v222 = vsel %vm217, %v129, 0
    %224 = vmatprep.subr.mxu0 0.0
    %225 = vmatpush1.msra.mxu0 0.0
    %226 = vmatprep.subr.mxu0 0.0
    %227 = vmatpush1.msra.mxu0 0.0
    %228 = vmatprep.subr.mxu0 0.0
    %229 = vmatpush1.msra.mxu0 0.0
    %230 = vmatprep.subr.mxu0 0.0
    %231 = vmatpush1.msra.mxu0 0.0
    %232 = vmatprep.subr.mxu0 0.0
    %233 = vmatpush1.msra.mxu0 0.0
    %234 = vmatprep.subr.mxu0 0.0
    %235 = vmatpush1.msra.mxu0 0.0
    %236 = vmatprep.subr.mxu0 0.0
    %237 = vmatpush1.msra.mxu0 0.0
    %238 = vmatprep.subr.mxu0 0.0
    %239 = vmatpush1.msra.mxu0 0.0
    %240 = vmatprep.subr.mxu0 0.0
    %241 = vmatpush1.msra.mxu0 0.0
    %242 = vmatprep.subr.mxu0 0.0
    %243 = vmatpush1.msra.mxu0 0.0
    %244 = vmatprep.subr.mxu0 0.0
    %245 = vmatpush1.msra.mxu0 0.0
    %246 = vmatprep.subr.mxu0 0.0
    %247 = vmatpush1.msra.mxu0 0.0
    %248 = vmatprep.subr.mxu0 0.0
    %249 = vmatpush1.msra.mxu0 %v133
    %250 = vmatprep.subr.mxu0 0.0
    %251 = vmatpush1.msra.mxu0 %v132
    %252 = vmatprep.subr.mxu0 0.0
    %253 = vmatpush1.msra.mxu0 %v131
    %254 = vmatprep.subr.mxu0 0.0
    %255 = vmatpush1.msra.mxu0 %v130
    %256 = vmatprep.subr.mxu0 0.0
    %257 = vmatpush2.msra.mxu0 0.0
    %258 = vmatprep.subr.mxu0 0.0
    %259 = vmatpush2.msra.mxu0 0.0
    %260 = vmatprep.subr.mxu0 0.0
    %261 = vmatpush2.msra.mxu0 0.0
    %262 = vmatprep.subr.mxu0 0.0
    %263 = vmatpush2.msra.mxu0 0.0
    %264 = vmatprep.subr.mxu0 0.0
    %265 = vmatpush2.msra.mxu0 0.0
    %266 = vmatprep.subr.mxu0 0.0
    %267 = vmatpush2.msra.mxu0 0.0
    %268 = vmatprep.subr.mxu0 0.0
    %269 = vmatpush2.msra.mxu0 0.0
    %270 = vmatprep.subr.mxu0 0.0
    %271 = vmatpush2.msra.mxu0 0.0
    %272 = vmatprep.subr.mxu0 0.0
    %273 = vmatpush2.msra.mxu0 0.0
    %274 = vmatprep.subr.mxu0 0.0
    %275 = vmatpush2.msra.mxu0 0.0
    %276 = vmatprep.subr.mxu0 0.0
    %277 = vmatpush2.msra.mxu0 0.0
    %278 = vmatprep.subr.mxu0 0.0
    %279 = vmatpush2.msra.mxu0 0.0
    %280 = vmatprep.subr.mxu0 0.0
    %281 = vmatpush2.msra.mxu0 0.0
    %282 = vmatprep.subr.mxu0 0.0
    %283 = vmatpush2.msra.mxu0 0.0
    %284 = vmatprep.subr.mxu0 0.0
    %285 = vmatpush2.msra.mxu0 0.0
    %286 = vmatprep.subr.mxu0 0.0
    %287 = vmatpush2.msra.mxu0 0.0
    %288 = vmatprep.mubr.f32.mxu0 0.0
    %289 = vmatmul.mubr.f32.gmra.mxu0 %v219
    %v290 = vpop.f32.mrf.mxu0
    %v291 = vadd.f32 %v209, %v290
    %v292 = vpop.f32.mrf.mxu0
    %293 = vmatprep.mubr.f32.mxu0 0.0
    %294 = vmatmul.mubr.f32.gmra.mxu0 %v222
    %v295 = vpop.f32.mrf.mxu0
    %v296 = vadd.f32 %v214, %v295
    %v297 = vpop.f32.mrf.mxu0
    %298 = vdwg.mxu0
    %v299 = vld [vmem:[%s4] sm:$0x1]
    %v301 = vlaneseq
    %v302 = vshrl.u32 %v301, 7
    %v303 = vsub.s32 0, %v302
    %v304 = vrot.slane %v299, %v303
    %v306 = vadd.f32 %v291, %v304
    %v307 = vadd.f32 %v296, %v304
    %v308 = vmax.f32 %v306, 0.0
    %v309 = vmax.f32 %v307, 0.0
    %v310 = vld [vmem:[%s6] sm:$0xff]
    %v311 = vld [vmem:[%s6 + $0x8] sm:$0xff]
    %v312 = vld [vmem:[%s6 + $0x10] sm:$0xff]
    %v313 = vld [vmem:[%s6 + $0x18] sm:$0xff]
    %v314 = vld [vmem:[%s6 + $0x20] sm:$0xff]
    %v315 = vld [vmem:[%s6 + $0x28] sm:$0xff]
    %v316 = vld [vmem:[%s6 + $0x30] sm:$0xff]
    %v317 = vld [vmem:[%s6 + $0x38] sm:$0xff]
    %v318 = vld [vmem:[%s6 + $0x40] sm:$0xff]
    %v319 = vld [vmem:[%s6 + $0x48] sm:$0xff]
    %v320 = vld [vmem:[%s6 + $0x50] sm:$0xff]
    %v321 = vld [vmem:[%s6 + $0x58] sm:$0xff]
    %v322 = vld [vmem:[%s6 + $0x60] sm:$0xff]
    %v323 = vld [vmem:[%s6 + $0x68] sm:$0xff]
    %v324 = vld [vmem:[%s6 + $0x70] sm:$0xff]
    %v325 = vld [vmem:[%s6 + $0x78] sm:$0xff]
    %v326 = vld [vmem:[%s7] sm:$0x1]
    %v328 = vlaneseq
    %v329 = vshrl.u32 %v328, 7
    %v330 = vsub.s32 0, %v329
    %v331 = vrot.slane %v326, %v330
    %333 = vmatprep.subr.mxu0 0.0
    %334 = vmatpush1.msra.mxu0 %v325
    %335 = vmatprep.subr.mxu0 0.0
    %336 = vmatpush1.msra.mxu0 %v324
    %337 = vmatprep.subr.mxu0 0.0
    %338 = vmatpush1.msra.mxu0 %v323
    %339 = vmatprep.subr.mxu0 0.0
    %340 = vmatpush1.msra.mxu0 %v322
    %341 = vmatprep.subr.mxu0 0.0
    %342 = vmatpush1.msra.mxu0 %v321
    %343 = vmatprep.subr.mxu0 0.0
    %344 = vmatpush1.msra.mxu0 %v320
    %345 = vmatprep.subr.mxu0 0.0
    %346 = vmatpush1.msra.mxu0 %v319
    %347 = vmatprep.subr.mxu0 0.0
    %348 = vmatpush1.msra.mxu0 %v318
    %349 = vmatprep.subr.mxu0 0.0
    %350 = vmatpush1.msra.mxu0 %v317
    %351 = vmatprep.subr.mxu0 0.0
    %352 = vmatpush1.msra.mxu0 %v316
    %353 = vmatprep.subr.mxu0 0.0
    %354 = vmatpush1.msra.mxu0 %v315
    %355 = vmatprep.subr.mxu0 0.0
    %356 = vmatpush1.msra.mxu0 %v314
    %357 = vmatprep.subr.mxu0 0.0
    %358 = vmatpush1.msra.mxu0 %v313
    %359 = vmatprep.subr.mxu0 0.0
    %360 = vmatpush1.msra.mxu0 %v312
    %361 = vmatprep.subr.mxu0 0.0
    %362 = vmatpush1.msra.mxu0 %v311
    %363 = vmatprep.subr.mxu0 0.0
    %364 = vmatpush1.msra.mxu0 %v310
    %365 = vmatprep.subr.mxu0 0.0
    %366 = vmatpush2.msra.mxu0 0.0
    %367 = vmatprep.subr.mxu0 0.0
    %368 = vmatpush2.msra.mxu0 0.0
    %369 = vmatprep.subr.mxu0 0.0
    %370 = vmatpush2.msra.mxu0 0.0
    %371 = vmatprep.subr.mxu0 0.0
    %372 = vmatpush2.msra.mxu0 0.0
    %373 = vmatprep.subr.mxu0 0.0
    %374 = vmatpush2.msra.mxu0 0.0
    %375 = vmatprep.subr.mxu0 0.0
    %376 = vmatpush2.msra.mxu0 0.0
    %377 = vmatprep.subr.mxu0 0.0
    %378 = vmatpush2.msra.mxu0 0.0
    %379 = vmatprep.subr.mxu0 0.0
    %380 = vmatpush2.msra.mxu0 0.0
    %381 = vmatprep.subr.mxu0 0.0
    %382 = vmatpush2.msra.mxu0 0.0
    %383 = vmatprep.subr.mxu0 0.0
    %384 = vmatpush2.msra.mxu0 0.0
    %385 = vmatprep.subr.mxu0 0.0
    %386 = vmatpush2.msra.mxu0 0.0
    %387 = vmatprep.subr.mxu0 0.0
    %388 = vmatpush2.msra.mxu0 0.0
    %389 = vmatprep.subr.mxu0 0.0
    %390 = vmatpush2.msra.mxu0 0.0
    %391 = vmatprep.subr.mxu0 0.0
    %392 = vmatpush2.msra.mxu0 0.0
    %393 = vmatprep.subr.mxu0 0.0
    %394 = vmatpush2.msra.mxu0 0.0
    %395 = vmatprep.subr.mxu0 0.0
    %396 = vmatpush2.msra.mxu0 0.0
    %397 = vmatprep.mubr.f32.mxu0 0.0
    %398 = vmatmul.mubr.f32.gmra.mxu0 %v308
    %v399 = vpop.f32.mrf.mxu0
    %v400 = vadd.f32 %v331, %v399
    %v401 = vpop.f32.mrf.mxu0
    %402 = vmatprep.mubr.f32.mxu0 0.0
    %403 = vmatmul.mubr.f32.gmra.mxu0 %v309
    %v404 = vpop.f32.mrf.mxu0
    %v405 = vadd.f32 %v331, %v404
    %v406 = vpop.f32.mrf.mxu0
    %407 = vdwg.mxu0
    %v408 = vmax.f32 %v400, 0.0
    %v409 = vmax.f32 %v405, 0.0
    %v410 = vld [vmem:[%s8] sm:$0xff]
    %v411 = vld [vmem:[%s8 + $0x8] sm:$0xff]
    %v412 = vld [vmem:[%s8 + $0x10] sm:$0xff]
    %v413 = vld [vmem:[%s8 + $0x18] sm:$0xff]
    %v414 = vld [vmem:[%s8 + $0x20] sm:$0xff]
    %v415 = vld [vmem:[%s8 + $0x28] sm:$0xff]
    %v416 = vld [vmem:[%s8 + $0x30] sm:$0xff]
    %v417 = vld [vmem:[%s8 + $0x38] sm:$0xff]
    %v418 = vld [vmem:[%s8 + $0x40] sm:$0xff]
    %v419 = vld [vmem:[%s8 + $0x48] sm:$0xff]
    %v420 = vld [vmem:[%s8 + $0x50] sm:$0xff]
    %v421 = vld [vmem:[%s8 + $0x58] sm:$0xff]
    %v422 = vld [vmem:[%s8 + $0x60] sm:$0xff]
    %v423 = vld [vmem:[%s8 + $0x68] sm:$0xff]
    %v424 = vld [vmem:[%s8 + $0x70] sm:$0xff]
    %v425 = vld [vmem:[%s8 + $0x78] sm:$0xff]
    %v426 = vld [vmem:[%s9] sm:$0x1]
    %v428 = vlaneseq
    %v429 = vshrl.u32 %v428, 7
    %v430 = vsub.s32 0, %v429
    %v431 = vrot.slane %v426, %v430
    %433 = vmatprep.subr.mxu0 0.0
    %434 = vmatpush1.msra.mxu0 %v425
    %435 = vmatprep.subr.mxu0 0.0
    %436 = vmatpush1.msra.mxu0 %v424
    %437 = vmatprep.subr.mxu0 0.0
    %438 = vmatpush1.msra.mxu0 %v423
    %439 = vmatprep.subr.mxu0 0.0
    %440 = vmatpush1.msra.mxu0 %v422
    %441 = vmatprep.subr.mxu0 0.0
    %442 = vmatpush1.msra.mxu0 %v421
    %443 = vmatprep.subr.mxu0 0.0
    %444 = vmatpush1.msra.mxu0 %v420
    %445 = vmatprep.subr.mxu0 0.0
    %446 = vmatpush1.msra.mxu0 %v419
    %447 = vmatprep.subr.mxu0 0.0
    %448 = vmatpush1.msra.mxu0 %v418
    %449 = vmatprep.subr.mxu0 0.0
    %450 = vmatpush1.msra.mxu0 %v417
    %451 = vmatprep.subr.mxu0 0.0
    %452 = vmatpush1.msra.mxu0 %v416
    %453 = vmatprep.subr.mxu0 0.0
    %454 = vmatpush1.msra.mxu0 %v415
    %455 = vmatprep.subr.mxu0 0.0
    %456 = vmatpush1.msra.mxu0 %v414
    %457 = vmatprep.subr.mxu0 0.0
    %458 = vmatpush1.msra.mxu0 %v413
    %459 = vmatprep.subr.mxu0 0.0
    %460 = vmatpush1.msra.mxu0 %v412
    %461 = vmatprep.subr.mxu0 0.0
    %462 = vmatpush1.msra.mxu0 %v411
    %463 = vmatprep.subr.mxu0 0.0
    %464 = vmatpush1.msra.mxu0 %v410
    %465 = vmatprep.subr.mxu0 0.0
    %466 = vmatpush2.msra.mxu0 0.0
    %467 = vmatprep.subr.mxu0 0.0
    %468 = vmatpush2.msra.mxu0 0.0
    %469 = vmatprep.subr.mxu0 0.0
    %470 = vmatpush2.msra.mxu0 0.0
    %471 = vmatprep.subr.mxu0 0.0
    %472 = vmatpush2.msra.mxu0 0.0
    %473 = vmatprep.subr.mxu0 0.0
    %474 = vmatpush2.msra.mxu0 0.0
    %475 = vmatprep.subr.mxu0 0.0
    %476 = vmatpush2.msra.mxu0 0.0
    %477 = vmatprep.subr.mxu0 0.0
    %478 = vmatpush2.msra.mxu0 0.0
    %479 = vmatprep.subr.mxu0 0.0
    %480 = vmatpush2.msra.mxu0 0.0
    %481 = vmatprep.subr.mxu0 0.0
    %482 = vmatpush2.msra.mxu0 0.0
    %483 = vmatprep.subr.mxu0 0.0
    %484 = vmatpush2.msra.mxu0 0.0
    %485 = vmatprep.subr.mxu0 0.0
    %486 = vmatpush2.msra.mxu0 0.0
    %487 = vmatprep.subr.mxu0 0.0
    %488 = vmatpush2.msra.mxu0 0.0
    %489 = vmatprep.subr.mxu0 0.0
    %490 = vmatpush2.msra.mxu0 0.0
    %491 = vmatprep.subr.mxu0 0.0
    %492 = vmatpush2.msra.mxu0 0.0
    %493 = vmatprep.subr.mxu0 0.0
    %494 = vmatpush2.msra.mxu0 0.0
    %495 = vmatprep.subr.mxu0 0.0
    %496 = vmatpush2.msra.mxu0 0.0
    %497 = vmatprep.mubr.f32.mxu0 0.0
    %498 = vmatmul.mubr.f32.gmra.mxu0 %v408
    %v499 = vpop.f32.mrf.mxu0
    %v500 = vadd.f32 %v431, %v499
    %v501 = vpop.f32.mrf.mxu0
    %502 = vmatprep.mubr.f32.mxu0 0.0
    %503 = vmatmul.mubr.f32.gmra.mxu0 %v409
    %v504 = vpop.f32.mrf.mxu0
    %v505 = vadd.f32 %v431, %v504
    %v506 = vpop.f32.mrf.mxu0
    %507 = vdwg.mxu0
    %v508 = vld [vmem:[%s10] sm:$0xff]
    %v509 = vld [vmem:[%s10 + $0x8] sm:$0xff]
    %v510 = vld [vmem:[%s10 + $0x10] sm:$0xff]
    %v511 = vld [vmem:[%s10 + $0x18] sm:$0xff]
    %v512 = vld [vmem:[#allocation8] sm:$0x1]
    %v514 = vlaneseq
    %v515 = vshrl.u32 %v514, 7
    %v516 = vsub.s32 0, %v515
    %v517 = vrot.slane %v512, %v516
    %v520 = vsel %vm217, %v500, 0
    %v523 = vsel %vm217, %v505, 0
    %525 = vmatprep.subr.mxu0 0.0
    %526 = vmatpush1.msra.mxu0 0.0
    %527 = vmatprep.subr.mxu0 0.0
    %528 = vmatpush1.msra.mxu0 0.0
    %529 = vmatprep.subr.mxu0 0.0
    %530 = vmatpush1.msra.mxu0 0.0
    %531 = vmatprep.subr.mxu0 0.0
    %532 = vmatpush1.msra.mxu0 0.0
    %533 = vmatprep.subr.mxu0 0.0
    %534 = vmatpush1.msra.mxu0 0.0
    %535 = vmatprep.subr.mxu0 0.0
    %536 = vmatpush1.msra.mxu0 0.0
    %537 = vmatprep.subr.mxu0 0.0
    %538 = vmatpush1.msra.mxu0 0.0
    %539 = vmatprep.subr.mxu0 0.0
    %540 = vmatpush1.msra.mxu0 0.0
    %541 = vmatprep.subr.mxu0 0.0
    %542 = vmatpush1.msra.mxu0 0.0
    %543 = vmatprep.subr.mxu0 0.0
    %544 = vmatpush1.msra.mxu0 0.0
    %545 = vmatprep.subr.mxu0 0.0
    %546 = vmatpush1.msra.mxu0 0.0
    %547 = vmatprep.subr.mxu0 0.0
    %548 = vmatpush1.msra.mxu0 0.0
    %549 = vmatprep.subr.mxu0 0.0
    %550 = vmatpush1.msra.mxu0 %v511
    %551 = vmatprep.subr.mxu0 0.0
    %552 = vmatpush1.msra.mxu0 %v510
    %553 = vmatprep.subr.mxu0 0.0
    %554 = vmatpush1.msra.mxu0 %v509
    %555 = vmatprep.subr.mxu0 0.0
    %556 = vmatpush1.msra.mxu0 %v508
    %557 = vmatprep.subr.mxu0 0.0
    %558 = vmatpush2.msra.mxu0 0.0
    %559 = vmatprep.subr.mxu0 0.0
    %560 = vmatpush2.msra.mxu0 0.0
    %561 = vmatprep.subr.mxu0 0.0
    %562 = vmatpush2.msra.mxu0 0.0
    %563 = vmatprep.subr.mxu0 0.0
    %564 = vmatpush2.msra.mxu0 0.0
    %565 = vmatprep.subr.mxu0 0.0
    %566 = vmatpush2.msra.mxu0 0.0
    %567 = vmatprep.subr.mxu0 0.0
    %568 = vmatpush2.msra.mxu0 0.0
    %569 = vmatprep.subr.mxu0 0.0
    %570 = vmatpush2.msra.mxu0 0.0
    %571 = vmatprep.subr.mxu0 0.0
    %572 = vmatpush2.msra.mxu0 0.0
    %573 = vmatprep.subr.mxu0 0.0
    %574 = vmatpush2.msra.mxu0 0.0
    %575 = vmatprep.subr.mxu0 0.0
    %576 = vmatpush2.msra.mxu0 0.0
    %577 = vmatprep.subr.mxu0 0.0
    %578 = vmatpush2.msra.mxu0 0.0
    %579 = vmatprep.subr.mxu0 0.0
    %580 = vmatpush2.msra.mxu0 0.0
    %581 = vmatprep.subr.mxu0 0.0
    %582 = vmatpush2.msra.mxu0 0.0
    %583 = vmatprep.subr.mxu0 0.0
    %584 = vmatpush2.msra.mxu0 0.0
    %585 = vmatprep.subr.mxu0 0.0
    %586 = vmatpush2.msra.mxu0 0.0
    %587 = vmatprep.subr.mxu0 0.0
    %588 = vmatpush2.msra.mxu0 0.0
    %589 = vmatprep.mubr.f32.mxu0 0.0
    %590 = vmatmul.mubr.f32.gmra.mxu0 %v520
    %v591 = vpop.f32.mrf.mxu0
    %v592 = vadd.f32 %v517, %v591
    %v593 = vpop.f32.mrf.mxu0
    %594 = vmatprep.mubr.f32.mxu0 0.0
    %595 = vmatmul.mubr.f32.gmra.mxu0 %v523
    %v596 = vpop.f32.mrf.mxu0
    %v597 = vadd.f32 %v517, %v596
    %v598 = vpop.f32.mrf.mxu0
    %599 = vdwg.mxu0
    %v600 = vld [vmem:[#allocation5] sm:$0xff]
    %v601 = vld [vmem:[#allocation5 + $0x8] sm:$0xff]
    %v602 = vld [vmem:[#allocation10] sm:$0xff]
    %v603 = vld [vmem:[#allocation10 + $0x8] sm:$0xff]
    %v604 = vld [vmem:[#allocation10 + $0x10] sm:$0xff]
    %v605 = vld [vmem:[#allocation10 + $0x18] sm:$0xff]
    %v606 = vld [vmem:[%s13] sm:$0x1]
    %v608 = vlaneseq
    %v609 = vshrl.u32 %v608, 7
    %v610 = vsub.s32 0, %v609
    %v611 = vrot.slane %v606, %v610
    %v614 = vsel %vm217, %v600, 0
    %v617 = vsel %vm217, %v601, 0
    %619 = vmatprep.subr.mxu0 0.0
    %620 = vmatpush1.msra.mxu0 0.0
    %621 = vmatprep.subr.mxu0 0.0
    %622 = vmatpush1.msra.mxu0 0.0
    %623 = vmatprep.subr.mxu0 0.0
    %624 = vmatpush1.msra.mxu0 0.0
    %625 = vmatprep.subr.mxu0 0.0
    %626 = vmatpush1.msra.mxu0 0.0
    %627 = vmatprep.subr.mxu0 0.0
    %628 = vmatpush1.msra.mxu0 0.0
    %629 = vmatprep.subr.mxu0 0.0
    %630 = vmatpush1.msra.mxu0 0.0
    %631 = vmatprep.subr.mxu0 0.0
    %632 = vmatpush1.msra.mxu0 0.0
    %633 = vmatprep.subr.mxu0 0.0
    %634 = vmatpush1.msra.mxu0 0.0
    %635 = vmatprep.subr.mxu0 0.0
    %636 = vmatpush1.msra.mxu0 0.0
    %637 = vmatprep.subr.mxu0 0.0
    %638 = vmatpush1.msra.mxu0 0.0
    %639 = vmatprep.subr.mxu0 0.0
    %640 = vmatpush1.msra.mxu0 0.0
    %641 = vmatprep.subr.mxu0 0.0
    %642 = vmatpush1.msra.mxu0 0.0
    %643 = vmatprep.subr.mxu0 0.0
    %644 = vmatpush1.msra.mxu0 %v605
    %645 = vmatprep.subr.mxu0 0.0
    %646 = vmatpush1.msra.mxu0 %v604
    %647 = vmatprep.subr.mxu0 0.0
    %648 = vmatpush1.msra.mxu0 %v603
    %649 = vmatprep.subr.mxu0 0.0
    %650 = vmatpush1.msra.mxu0 %v602
    %651 = vmatprep.subr.mxu0 0.0
    %652 = vmatpush2.msra.mxu0 0.0
    %653 = vmatprep.subr.mxu0 0.0
    %654 = vmatpush2.msra.mxu0 0.0
    %655 = vmatprep.subr.mxu0 0.0
    %656 = vmatpush2.msra.mxu0 0.0
    %657 = vmatprep.subr.mxu0 0.0
    %658 = vmatpush2.msra.mxu0 0.0
    %659 = vmatprep.subr.mxu0 0.0
    %660 = vmatpush2.msra.mxu0 0.0
    %661 = vmatprep.subr.mxu0 0.0
    %662 = vmatpush2.msra.mxu0 0.0
    %663 = vmatprep.subr.mxu0 0.0
    %664 = vmatpush2.msra.mxu0 0.0
    %665 = vmatprep.subr.mxu0 0.0
    %666 = vmatpush2.msra.mxu0 0.0
    %667 = vmatprep.subr.mxu0 0.0
    %668 = vmatpush2.msra.mxu0 0.0
    %669 = vmatprep.subr.mxu0 0.0
    %670 = vmatpush2.msra.mxu0 0.0
    %671 = vmatprep.subr.mxu0 0.0
    %672 = vmatpush2.msra.mxu0 0.0
    %673 = vmatprep.subr.mxu0 0.0
    %674 = vmatpush2.msra.mxu0 0.0
    %675 = vmatprep.subr.mxu0 0.0
    %676 = vmatpush2.msra.mxu0 0.0
    %677 = vmatprep.subr.mxu0 0.0
    %678 = vmatpush2.msra.mxu0 0.0
    %679 = vmatprep.subr.mxu0 0.0
    %680 = vmatpush2.msra.mxu0 0.0
    %681 = vmatprep.subr.mxu0 0.0
    %682 = vmatpush2.msra.mxu0 0.0
    %683 = vmatprep.mubr.f32.mxu0 0.0
    %684 = vmatmul.mubr.f32.gmra.mxu0 %v614
    %v685 = vpop.f32.mrf.mxu0
    %v686 = vadd.f32 %v611, %v685
    %v687 = vpop.f32.mrf.mxu0
    %688 = vmatprep.mubr.f32.mxu0 0.0
    %689 = vmatmul.mubr.f32.gmra.mxu0 %v617
    %v690 = vpop.f32.mrf.mxu0
    %v691 = vadd.f32 %v611, %v690
    %v692 = vpop.f32.mrf.mxu0
    %693 = vdwg.mxu0
    %v694 = vadd.f32 %v592, %v686
    %v695 = vadd.f32 %v597, %v691
    %v696 = vxor.u32 %v694, 2147483648
    %v697 = vxor.u32 %v695, 2147483648
    %v698 = vmul.f32 %v696, 1.442695
    %v699 = vpow.pop %v698
    %v700 = vmul.f32 %v697, 1.442695
    %v701 = vpow.pop %v700
    %v702 = vadd.f32 %v699, 1.0
    %v703 = vadd.f32 %v701, 1.0
    %v704 = vrcp.pop %v702
    %v705 = vmul.f32 1.0, %v704
    %v706 = vrcp.pop %v703
    %v707 = vmul.f32 1.0, %v706
    %710 = vrot.lane.b32.xlu0 %v686, 64
    %v711 = vpop.permute.xlu0 %710
    %712 = vrot.lane.b32.xlu0 %v691, 64
    %v713 = vpop.permute.xlu0 %712
    %v716 = vmul.f32 %v705, %v711
    %v717 = vmul.f32 %v707, %v713
    %720 = vrot.lane.b32.xlu0 %v716, 64
    %v721 = vpop.permute.xlu0 %720
    %722 = vrot.lane.b32.xlu0 %v717, 64
    %v723 = vpop.permute.xlu0 %722
    %v726 = vadd.f32 %v592, %v721
    %v727 = vadd.f32 %v597, %v723
    %v728 = vtanh.pop %v726
    %v729 = vtanh.pop %v727
    %v730 = vsub.f32 1.0, %v705
    %v731 = vsub.f32 1.0, %v707
    %734 = vrot.lane.b32.xlu0 %v728, 96
    %v735 = vpop.permute.xlu0 %734
    %736 = vrot.lane.b32.xlu0 %v729, 96
    %v737 = vpop.permute.xlu0 %736
    %v740 = vmul.f32 %v730, %v735
    %v741 = vmul.f32 %v731, %v737
    %742 = vrot.lane.b32.xlu0 %v600, 32
    %v743 = vpop.permute.xlu0 %742
    %744 = vrot.lane.b32.xlu0 %v601, 32
    %v745 = vpop.permute.xlu0 %744
    %v748 = vmul.f32 %v705, %v743
    %v749 = vmul.f32 %v707, %v745
    %v750 = vadd.f32 %v740, %v748
    %v751 = vadd.f32 %v741, %v749
    %754 = vrot.lane.b32.xlu0 %v750, 96
    %v755 = vpop.permute.xlu0 %754
    %756 = vrot.lane.b32.xlu0 %v751, 96
    %v757 = vpop.permute.xlu0 %756
    %760 = vst.msk [vmem:[#allocation11] sm:$0xff] %vm217, %v755
    %761 = vst.msk [vmem:[#allocation11 + $0x8] sm:$0xff] %vm217, %v757
    // Predicated region
    $region78: #{tpu_custom_call.1} parent=1 // pred_check
      _
    $region79: #{tpu_custom_call.1} parent=1 // pred_check_branch
      %763 = sbr.rel (0) target = $region81
    $region80: #{tpu_custom_call.1} parent=1 // pred_region
      %s765 = ssub.s32 256, 256
      %766 = vsyncadd [#allocation4], %s765
      %s767 = sshll.u32 [#allocation11], 4
      %s768 = int_to_ptr.vmem [resolvable:$true] %s767
      %773 = dma.vmem_to_hbm [thread:$0]  %s768, 256, %s14, [#allocation4], 128, 128, 8
    $region81: #{tpu_custom_call.1} parent=1 // pred_fallthru
      _
    // Predicated region
    $region82: #{tpu_custom_call.1} parent=1 // pred_check
      _
    $region83: #{tpu_custom_call.1} parent=1 // pred_check_branch
      %775 = sbr.rel (0) target = $region85
    $region84: #{tpu_custom_call.1} parent=1 // pred_region
      %776 = dma.done [#allocation4], 256
    $region85: #{tpu_custom_call.1} parent=1 // pred_fallthru
      _
    %777 = vsyncpa [#allocation3], 1
    %778 = vsyncpa [#allocation6], 1
    %779 = vsyncpa [#allocation9], 1
    %780 = vsyncpa [#allocation4], 1

</llo_original>
